<compile_context>
chip_gen: v6e
topology: v6e:2x2x1
jax: 0.10.0
libtpu: 0.0.40
codegen_flags: <defaults>
</compile_context>

<pallas_src>
import functools

import jax
import jax.numpy as jnp
from jax.experimental import pallas as pl
from jax.experimental.pallas import tpu as pltpu


STATE_DIM = 3        # Pendulum-v1 observation dim
HIDDEN_DIM = 128
ACTION_DIM = 11
HEAD_DIM = ACTION_DIM + 1   # [A columns | (V - mean_a(A)) column]


def _round_up(x, m):
    return ((x + m - 1) // m) * m


def _choose_tile_b(B, tile_b_max=2048, split_threshold=256):
    """Pick a batch tile.

    Small batches: one tile (latency-bound, avoid per-step overhead).
    Large batches: at least 2 tiles so dimension_semantics=("parallel",)
    shards across both v7x TensorCores (harmless on 1-TC v5e/v6e), capped at
    tile_b_max per step.
    """
    if B <= split_threshold:
        return max(8, _round_up(B, 8))
    n_tiles = max(2, pl.cdiv(B, tile_b_max))
    return max(8, _round_up(pl.cdiv(B, n_tiles), 8))


def vanet_kernel(x_ref, w1_ref, b1_ref, wh_ref, bh_ref, q_ref, *, fc1_on_mxu):
    x = x_ref[...]          # (tile_b, STATE_DIM) f32
    w1 = w1_ref[...]        # (STATE_DIM, HIDDEN_DIM) f32

    if fc1_on_mxu:
        # Large tiles: offload the saturating VALU slot onto the (otherwise
        # mostly idle) MXU; K=3 padding is cheap relative to the VPU passes.
        acc = jnp.dot(x, w1, preferred_element_type=jnp.float32) + b1_ref[...]
    else:
        # Small/medium tiles: K = 3 contraction as broadcast VPU FMAs, with
        # the bias initializing the accumulator (saves one full VPU pass).
        acc = b1_ref[...] + x[:, 0:1] * w1[0:1, :]
        for k in range(1, STATE_DIM):
            acc = acc + x[:, k:k + 1] * w1[k:k + 1, :]

    h = jnp.maximum(acc, 0.0)                      # f32 ReLU (VPU)

    # Fused heads: one bf16 MXU matmul, columns = [A | V - mean_a(A)].
    # Cast only at the dot input; bias add stays f32.
    out = jnp.dot(h.astype(jnp.bfloat16), wh_ref[...],
                  preferred_element_type=jnp.float32) + bh_ref[...]

    # Dueling combine: Q = A + (V - mean_a(A))  (single broadcast add).
    q_ref[...] = (out[:, :ACTION_DIM]
                  + out[:, ACTION_DIM:ACTION_DIM + 1]).astype(q_ref.dtype)


def vanet_forward(x, fused_params, *, tile_b=None, tile_b_max=2048,
                  split_threshold=256, fc1_on_mxu=None):
    """Fused VAnet forward. x: (B, STATE_DIM) f32 -> (B, ACTION_DIM) f32."""
    w1, b1, wh, bh = fused_params
    B = x.shape[0]

    if tile_b is None:
        tile_b = _choose_tile_b(B, tile_b_max, split_threshold)
    tile_b = max(8, _round_up(tile_b, 8))

    if fc1_on_mxu is None:
        fc1_on_mxu = tile_b >= 512

    grid = (pl.cdiv(B, tile_b),)   # partial last block handled by Pallas masking

    kernel = functools.partial(vanet_kernel, fc1_on_mxu=fc1_on_mxu)

    return pl.pallas_call(
        kernel,
        out_shape=jax.ShapeDtypeStruct((B, ACTION_DIM), jnp.float32),
        grid=grid,
        in_specs=[
            pl.BlockSpec((tile_b, STATE_DIM), lambda i: (i, 0)),
            # Weights/biases: constant index_map -> VMEM-resident across steps.
            pl.BlockSpec((STATE_DIM, HIDDEN_DIM), lambda i: (0, 0)),
            pl.BlockSpec((1, HIDDEN_DIM), lambda i: (0, 0)),
            pl.BlockSpec((HIDDEN_DIM, HEAD_DIM), lambda i: (0, 0)),
            pl.BlockSpec((1, HEAD_DIM), lambda i: (0, 0)),
        ],
        out_specs=pl.BlockSpec((tile_b, ACTION_DIM), lambda i: (i, 0)),
        compiler_params=pltpu.CompilerParams(
            dimension_semantics=("parallel",),    # v7x: shard batch tiles across both TCs
            vmem_limit_bytes=32 * 1024 * 1024,    # headroom vs v5e 16 MiB default; fits v7x 64 MiB
        ),
    )(x, w1, b1, wh, bh)


def init_params(key):
    """PyTorch-Linear-style (uniform +/- 1/sqrt(fan_in)) init.

    Weights stored as (in_features, out_features), i.e. transposed vs torch.
    """
    k1, k2, k3, k4, k5, k6 = jax.random.split(key, 6)

    def unif(k, shape, fan_in):
        bound = 1.0 / jnp.sqrt(jnp.float32(fan_in))
        return jax.random.uniform(k, shape, jnp.float32, -bound, bound)

    w1 = unif(k1, (STATE_DIM, HIDDEN_DIM), STATE_DIM)
    b1 = unif(k2, (1, HIDDEN_DIM), STATE_DIM)
    wa = unif(k3, (HIDDEN_DIM, ACTION_DIM), HIDDEN_DIM)
    ba = unif(k4, (1, ACTION_DIM), HIDDEN_DIM)
    wv = unif(k5, (HIDDEN_DIM, 1), HIDDEN_DIM)
    bv = unif(k6, (1, 1), HIDDEN_DIM)
    return (w1, b1, wa, ba, wv, bv)


def fuse_params(params, head_dtype=jnp.bfloat16):
    """Fused head weight [wa | wv - mean_a(wa)] (cast once for the MXU) and f32 bias."""
    w1, b1, wa, ba, wv, bv = params
    w_mean = jnp.mean(wa, axis=1, keepdims=True)            # (H, 1)
    b_mean = jnp.mean(ba, axis=1, keepdims=True)            # (1, 1)
    wh = jnp.concatenate([wa, wv - w_mean], axis=1).astype(head_dtype)  # (H, A+1)
    bh = jnp.concatenate([ba, bv - b_mean], axis=1)          # (1, A+1) f32
    return (w1, b1, wh, bh)


def vanet_reference(x, params):
    """Pure-JAX f32 reference mirroring the PyTorch forward (unfused params)."""
    w1, b1, wa, ba, wv, bv = params
    h = jnp.maximum(x @ w1 + b1, 0.0)
    a = h @ wa + ba
    v = h @ wv + bv
    return v + a - a.mean(axis=1, keepdims=True)


if __name__ == "__main__":
    key = jax.random.PRNGKey(0)
    kx1, kx2, kp = jax.random.split(key, 3)

    params = init_params(kp)
    fused = fuse_params(params)

    # Tolerances are loose because the head matmul runs in bf16 on the MXU.
    ATOL, RTOL = 3e-2, 1e-2

    # 1) Small batch, single partial block (B not a multiple of 8).
    batch = 5
    x_small = jax.random.normal(kx1, (batch, STATE_DIM), dtype=jnp.float32)
    q_small = jax.block_until_ready(vanet_forward(x_small, fused))
    q_small_ref = vanet_reference(x_small, params)
    assert q_small.shape == (batch, ACTION_DIM)
    assert jnp.allclose(q_small, q_small_ref, atol=ATOL, rtol=RTOL), (
        f"max err (small) = {jnp.max(jnp.abs(q_small - q_small_ref))}"
    )

    # 2) Multi-tile batch grid with a partial last block (52 = 3*16 + 4).
    batch2 = 52
    x_big = jax.random.normal(kx2, (batch2, STATE_DIM), dtype=jnp.float32)
    q_big = jax.block_until_ready(vanet_forward(x_big, fused, tile_b=16))
    q_big_ref = vanet_reference(x_big, params)
    assert q_big.shape == (batch2, ACTION_DIM)
    assert jnp.allclose(q_big, q_big_ref, atol=ATOL, rtol=RTOL), (
        f"max err (grid) = {jnp.max(jnp.abs(q_big - q_big_ref))}"
    )

    # 3) Exercise the fc1-on-MXU variant (used automatically at tile_b >= 512).
    q_mxu = jax.block_until_ready(
        vanet_forward(x_big, fused, tile_b=16, fc1_on_mxu=True))
    assert jnp.allclose(q_mxu, q_big_ref, atol=ATOL, rtol=RTOL), (
        f"max err (mxu fc1) = {jnp.max(jnp.abs(q_mxu - q_big_ref))}"
    )

    print("KERNEL_OK")
</pallas_src>

<mosaic_0001>
module attributes {stable_mosaic.version = 11 : i64} {
  func.func @vanet_kernel(%arg0: i32, %arg1: memref<8x3xf32, #tpu.memory_space<vmem>>, %arg2: memref<3x128xf32, #tpu.memory_space<vmem>>, %arg3: memref<1x128xf32, #tpu.memory_space<vmem>>, %arg4: memref<128x12xbf16, #tpu.memory_space<vmem>>, %arg5: memref<1x12xf32, #tpu.memory_space<vmem>>, %arg6: memref<8x11xf32, #tpu.memory_space<vmem>>) attributes {dimension_semantics = [#tpu.dimension_semantics<parallel>], iteration_bounds = array<i64: 1>, scalar_prefetch = 0 : i64, scratch_operands = 0 : i64, tpu.core_type = #tpu.core_type<tc>, window_params = [{transform_indices = @transform_0, window_bounds = array<i64: 8, 3>}, {pipeline_mode = #tpu.pipeline_mode<synchronous>, transform_indices = @transform_1, window_bounds = array<i64: 3, 128>}, {pipeline_mode = #tpu.pipeline_mode<synchronous>, transform_indices = @transform_2, window_bounds = array<i64: 1, 128>}, {pipeline_mode = #tpu.pipeline_mode<synchronous>, transform_indices = @transform_3, window_bounds = array<i64: 128, 12>}, {pipeline_mode = #tpu.pipeline_mode<synchronous>, transform_indices = @transform_4, window_bounds = array<i64: 1, 12>}, {transform_indices = @transform_5, window_bounds = array<i64: 8, 11>}]} {
    %c0 = arith.constant 0 : index
    %c0_0 = arith.constant 0 : index
    %0 = vector.load %arg1[%c0, %c0_0] : memref<8x3xf32, #tpu.memory_space<vmem>>, vector<8x3xf32>
    %c0_1 = arith.constant 0 : index
    %c0_2 = arith.constant 0 : index
    %1 = vector.load %arg2[%c0_1, %c0_2] : memref<3x128xf32, #tpu.memory_space<vmem>>, vector<3x128xf32>
    %c0_3 = arith.constant 0 : index
    %c0_4 = arith.constant 0 : index
    %2 = vector.load %arg3[%c0_3, %c0_4] : memref<1x128xf32, #tpu.memory_space<vmem>>, vector<1x128xf32>
    %3 = vector.extract_strided_slice %0 {offsets = [0, 0], sizes = [8, 1], strides = [1, 1]} : vector<8x3xf32> to vector<8x1xf32>
    %4 = vector.extract_strided_slice %1 {offsets = [0, 0], sizes = [1, 128], strides = [1, 1]} : vector<3x128xf32> to vector<1x128xf32>
    %5 = vector.broadcast %3 : vector<8x1xf32> to vector<8x128xf32>
    %6 = vector.broadcast %4 : vector<1x128xf32> to vector<8x128xf32>
    %7 = arith.mulf %5, %6 : vector<8x128xf32>
    %8 = vector.broadcast %2 : vector<1x128xf32> to vector<8x128xf32>
    %9 = arith.addf %8, %7 : vector<8x128xf32>
    %10 = vector.extract_strided_slice %0 {offsets = [0, 1], sizes = [8, 1], strides = [1, 1]} : vector<8x3xf32> to vector<8x1xf32>
    %11 = vector.extract_strided_slice %1 {offsets = [1, 0], sizes = [1, 128], strides = [1, 1]} : vector<3x128xf32> to vector<1x128xf32>
    %12 = vector.broadcast %10 : vector<8x1xf32> to vector<8x128xf32>
    %13 = vector.broadcast %11 : vector<1x128xf32> to vector<8x128xf32>
    %14 = arith.mulf %12, %13 : vector<8x128xf32>
    %15 = arith.addf %9, %14 : vector<8x128xf32>
    %16 = vector.extract_strided_slice %0 {offsets = [0, 2], sizes = [8, 1], strides = [1, 1]} : vector<8x3xf32> to vector<8x1xf32>
    %17 = vector.extract_strided_slice %1 {offsets = [2, 0], sizes = [1, 128], strides = [1, 1]} : vector<3x128xf32> to vector<1x128xf32>
    %18 = vector.broadcast %16 : vector<8x1xf32> to vector<8x128xf32>
    %19 = vector.broadcast %17 : vector<1x128xf32> to vector<8x128xf32>
    %20 = arith.mulf %18, %19 : vector<8x128xf32>
    %21 = arith.addf %15, %20 : vector<8x128xf32>
    %cst = arith.constant 0.000000e+00 : f32
    %22 = vector.broadcast %cst : f32 to vector<8x128xf32>
    %23 = arith.maximumf %21, %22 : vector<8x128xf32>
    %24 = arith.truncf %23 : vector<8x128xf32> to vector<8x128xbf16>
    %c0_5 = arith.constant 0 : index
    %c0_6 = arith.constant 0 : index
    %25 = vector.load %arg4[%c0_5, %c0_6] : memref<128x12xbf16, #tpu.memory_space<vmem>>, vector<128x12xbf16>
    %cst_7 = arith.constant dense<0.000000e+00> : vector<8x12xf32>
    %26 = tpu.matmul %24, %25, %cst_7 {dimension_numbers = #tpu.dot_dimension_numbers<[1], [0], [0], [1], [0, 0, 1, 1], [], []>} : vector<8x128xbf16>, vector<128x12xbf16>, vector<8x12xf32> -> vector<8x12xf32>
    %c0_8 = arith.constant 0 : index
    %c0_9 = arith.constant 0 : index
    %27 = vector.load %arg5[%c0_8, %c0_9] : memref<1x12xf32, #tpu.memory_space<vmem>>, vector<1x12xf32>
    %28 = vector.broadcast %27 : vector<1x12xf32> to vector<8x12xf32>
    %29 = arith.addf %26, %28 : vector<8x12xf32>
    %30 = vector.extract_strided_slice %29 {offsets = [0, 0], sizes = [8, 11], strides = [1, 1]} : vector<8x12xf32> to vector<8x11xf32>
    %31 = vector.extract_strided_slice %29 {offsets = [0, 11], sizes = [8, 1], strides = [1, 1]} : vector<8x12xf32> to vector<8x1xf32>
    %32 = vector.broadcast %31 : vector<8x1xf32> to vector<8x11xf32>
    %33 = arith.addf %30, %32 : vector<8x11xf32>
    %c0_10 = arith.constant 0 : index
    %c0_11 = arith.constant 0 : index
    %34 = vector.load %arg6[%c0_10, %c0_11] : memref<8x11xf32, #tpu.memory_space<vmem>>, vector<8x11xf32>
    tpu.vector_store %arg6[%c0_10, %c0_11], %33 {strides = array<i32>} : memref<8x11xf32, #tpu.memory_space<vmem>>, vector<8x11xf32>,
    return
  }
  func.func @transform_0(%arg0: i32) -> (i32, i32) {
    %c0_i32 = arith.constant 0 : i32
    %c0_i32_0 = arith.constant 0 : i32
    return %arg0, %c0_i32 : i32, i32
  }
  func.func @transform_1(%arg0: i32) -> (i32, i32) {
    %c0_i32 = arith.constant 0 : i32
    %c0_i32_0 = arith.constant 0 : i32
    %c0_i32_1 = arith.constant 0 : i32
    return %c0_i32, %c0_i32_0 : i32, i32
  }
  func.func @transform_2(%arg0: i32) -> (i32, i32) {
    %c0_i32 = arith.constant 0 : i32
    %c0_i32_0 = arith.constant 0 : i32
    %c0_i32_1 = arith.constant 0 : i32
    return %c0_i32, %c0_i32_0 : i32, i32
  }
  func.func @transform_3(%arg0: i32) -> (i32, i32) {
    %c0_i32 = arith.constant 0 : i32
    %c0_i32_0 = arith.constant 0 : i32
    %c0_i32_1 = arith.constant 0 : i32
    return %c0_i32, %c0_i32_0 : i32, i32
  }
  func.func @transform_4(%arg0: i32) -> (i32, i32) {
    %c0_i32 = arith.constant 0 : i32
    %c0_i32_0 = arith.constant 0 : i32
    %c0_i32_1 = arith.constant 0 : i32
    return %c0_i32, %c0_i32_0 : i32, i32
  }
  func.func @transform_5(%arg0: i32) -> (i32, i32) {
    %c0_i32 = arith.constant 0 : i32
    %c0_i32_0 = arith.constant 0 : i32
    return %arg0, %c0_i32 : i32, i32
  }
}

</mosaic_0001>

<llo_original>
// kernel: tpu_custom_call.1
$region0: #{tpu_custom_call.1}
  #allocation0 [shape = 'u32[]', space=smem, size = 0x4, offset = 0x4, fixed_abs, tag = 'smem constant byte address 0x4 - core index']
  #allocation1 [shape = 'u32[144,128]{1,0:T(1,128)}', space=vmem, size = 0x12000, scoped, tag = 'internal scratch']
  %s0 = inlined_call_operand.vmem [shape: f32[5,3], index: 0, kind: input, shape index: {}]
  %s1 = inlined_call_operand.vmem [shape: f32[3,128], index: 1, kind: input, shape index: {}]
  %s2 = inlined_call_operand.vmem [shape: f32[1,128], index: 2, kind: input, shape index: {}]
  %s3 = inlined_call_operand.vmem [shape: bf16[128,12], index: 3, kind: input, shape index: {}]
  %s4 = inlined_call_operand.vmem [shape: f32[1,12], index: 4, kind: input, shape index: {}]
  %s5 = inlined_call_operand.hbm [shape: f32[5,11], index: 5, kind: output, shape index: {}]
  %s6 = sld [smem:[#allocation0]]
  $region30: #{tpu_custom_call.1} parent=0
    _
  %s8 = ssub.s32 1, %s6
  %s9 = scalar_select 0, %s8, %s6
  $region1: #{tpu_custom_call.1} parent=0
    #allocation2 [shape = 'u8[4096]{0}', space=vmem, size = 0x1000, scoped, tag = 'output window, operand 0, single buffered']
    #allocation3 [shape = 's32[1]{0}', space=sflag, size = 0x4, scoped, tag = 'scoped memory for tpu_custom_call.1']
    %10 = vsyncpa [#allocation3], 0
    // Predicated region
    $region2: #{tpu_custom_call.1} parent=1 // pred_check
      _
    $region3: #{tpu_custom_call.1} parent=1 // pred_check_branch
      %12 = sbr.rel (0) target = $region5
    $region4: #{tpu_custom_call.1} parent=1 // pred_region
      _
    $region5: #{tpu_custom_call.1} parent=1 // pred_fallthru
      _
    // Predicated region
    $region6: #{tpu_custom_call.1} parent=1 // pred_check
      _
    $region7: #{tpu_custom_call.1} parent=1 // pred_check_branch
      %14 = sbr.rel (0) target = $region9
    $region8: #{tpu_custom_call.1} parent=1 // pred_region
      _
    $region9: #{tpu_custom_call.1} parent=1 // pred_fallthru
      _
    // Predicated region
    $region10: #{tpu_custom_call.1} parent=1 // pred_check
      _
    $region11: #{tpu_custom_call.1} parent=1 // pred_check_branch
      %16 = sbr.rel (0) target = $region13
    $region12: #{tpu_custom_call.1} parent=1 // pred_region
      _
    $region13: #{tpu_custom_call.1} parent=1 // pred_fallthru
      _
    // Predicated region
    $region14: #{tpu_custom_call.1} parent=1 // pred_check
      _
    $region15: #{tpu_custom_call.1} parent=1 // pred_check_branch
      %18 = sbr.rel (0) target = $region17
    $region16: #{tpu_custom_call.1} parent=1 // pred_region
      _
    $region17: #{tpu_custom_call.1} parent=1 // pred_fallthru
      _
    // Predicated region
    $region18: #{tpu_custom_call.1} parent=1 // pred_check
      _
    $region19: #{tpu_custom_call.1} parent=1 // pred_check_branch
      %20 = sbr.rel (0) target = $region21
    $region20: #{tpu_custom_call.1} parent=1 // pred_region
      _
    $region21: #{tpu_custom_call.1} parent=1 // pred_fallthru
      _
    %v22 = vld [vmem:[%s0] sm:$0xff]
    %v23 = vld [vmem:[%s1] sm:$0x7]
    %v24 = vld [vmem:[%s2] sm:$0x1]
    %26 = vset.pattern.permute.xlu0 0
    %27 = vperm.xlu0 %26, %v22
    %v28 = vpop.permute.xlu0 %27
    %v30 = vlaneseq
    %v31 = vshrl.u32 %v30, 7
    %v32 = vsub.s32 0, %v31
    %v33 = vrot.slane %v23, %v32
    %v34 = vmul.f32 %v28, %v33
    %v36 = vlaneseq
    %v37 = vshrl.u32 %v36, 7
    %v38 = vsub.s32 0, %v37
    %v39 = vrot.slane %v24, %v38
    %v41 = vadd.f32 %v39, %v34
    %42 = vset.pattern.permute.xlu0 1
    %43 = vperm.xlu0 %42, %v22
    %v44 = vpop.permute.xlu0 %43
    %v46 = vlaneseq
    %v47 = vshrl.u32 %v46, 7
    %v48 = vsub.s32 1, %v47
    %v49 = vrot.slane %v23, %v48
    %v50 = vmul.f32 %v44, %v49
    %v51 = vadd.f32 %v41, %v50
    %52 = vset.pattern.permute.xlu0 2
    %53 = vperm.xlu0 %52, %v22
    %v54 = vpop.permute.xlu0 %53
    %v56 = vlaneseq
    %v57 = vshrl.u32 %v56, 7
    %v58 = vsub.s32 2, %v57
    %v59 = vrot.slane %v23, %v58
    %v60 = vmul.f32 %v54, %v59
    %v61 = vadd.f32 %v51, %v60
    %v62 = vmax.f32 %v61, 0.0
    %v63 = vpack.c.bf16 %v62, %v62
    %v64 = vld [vmem:[%s3] sm:$0xf]
    %v65 = vld [vmem:[%s3 + $0x4] sm:$0xf]
    %v66 = vld [vmem:[%s3 + $0x8] sm:$0xf]
    %v67 = vld [vmem:[%s3 + $0xc] sm:$0xf]
    %v68 = vld [vmem:[%s3 + $0x10] sm:$0xf]
    %v69 = vld [vmem:[%s3 + $0x14] sm:$0xf]
    %v70 = vld [vmem:[%s3 + $0x18] sm:$0xf]
    %v71 = vld [vmem:[%s3 + $0x1c] sm:$0xf]
    %v72 = vld [vmem:[%s3 + $0x20] sm:$0xf]
    %v73 = vld [vmem:[%s3 + $0x24] sm:$0xf]
    %v74 = vld [vmem:[%s3 + $0x28] sm:$0xf]
    %v75 = vld [vmem:[%s3 + $0x2c] sm:$0xf]
    %v76 = vld [vmem:[%s3 + $0x30] sm:$0xf]
    %v77 = vld [vmem:[%s3 + $0x34] sm:$0xf]
    %v78 = vld [vmem:[%s3 + $0x38] sm:$0xf]
    %v79 = vld [vmem:[%s3 + $0x3c] sm:$0xf]
    %v80 = vld [vmem:[%s4] sm:$0x1]
    %v82 = vlaneseq
    %v83 = vshrl.u32 %v82, 7
    %v84 = vsub.s32 0, %v83
    %v85 = vrot.slane %v80, %v84
    %v103 = vunpack.c.l.b16 %v64
    %v104 = vunpack.c.l.b16 %v65
    %v105 = vunpack.c.l.b16 %v66
    %v106 = vunpack.c.l.b16 %v67
    %v107 = vunpack.c.l.b16 %v68
    %v108 = vunpack.c.l.b16 %v69
    %v109 = vunpack.c.l.b16 %v70
    %v110 = vunpack.c.l.b16 %v71
    %v111 = vunpack.c.l.b16 %v72
    %v112 = vunpack.c.l.b16 %v73
    %v113 = vunpack.c.l.b16 %v74
    %v114 = vunpack.c.l.b16 %v75
    %v115 = vunpack.c.l.b16 %v76
    %v116 = vunpack.c.l.b16 %v77
    %v117 = vunpack.c.l.b16 %v78
    %v118 = vunpack.c.l.b16 %v79
    %v119 = vpack.c.b16 %v104, %v103
    %v120 = vpack.c.b16 %v106, %v105
    %v121 = vpack.c.b16 %v108, %v107
    %v122 = vpack.c.b16 %v110, %v109
    %v123 = vpack.c.b16 %v112, %v111
    %v124 = vpack.c.b16 %v114, %v113
    %v125 = vpack.c.b16 %v116, %v115
    %v126 = vpack.c.b16 %v118, %v117
    %135 = vmatprep.subr.bf16.mxu0 0
    %136 = vmatpush1.bf16.msra.mxu0 %v126
    %137 = vmatprep.subr.bf16.mxu0 0
    %138 = vmatpush1.bf16.msra.mxu0 %v125
    %139 = vmatprep.subr.bf16.mxu0 0
    %140 = vmatpush1.bf16.msra.mxu0 %v124
    %141 = vmatprep.subr.bf16.mxu0 0
    %142 = vmatpush1.bf16.msra.mxu0 %v123
    %143 = vmatprep.subr.bf16.mxu0 0
    %144 = vmatpush1.bf16.msra.mxu0 %v122
    %145 = vmatprep.subr.bf16.mxu0 0
    %146 = vmatpush1.bf16.msra.mxu0 %v121
    %147 = vmatprep.subr.bf16.mxu0 0
    %148 = vmatpush1.bf16.msra.mxu0 %v120
    %149 = vmatprep.subr.bf16.mxu0 0
    %150 = vmatpush1.bf16.msra.mxu0 %v119
    %151 = vmatprep.subr.bf16.mxu0 0
    %152 = vmatpush2.bf16.msra.mxu0 0
    %153 = vmatprep.subr.bf16.mxu0 0
    %154 = vmatpush2.bf16.msra.mxu0 0
    %155 = vmatprep.subr.bf16.mxu0 0
    %156 = vmatpush2.bf16.msra.mxu0 0
    %157 = vmatprep.subr.bf16.mxu0 0
    %158 = vmatpush2.bf16.msra.mxu0 0
    %159 = vmatprep.subr.bf16.mxu0 0
    %160 = vmatpush2.bf16.msra.mxu0 0
    %161 = vmatprep.subr.bf16.mxu0 0
    %162 = vmatpush2.bf16.msra.mxu0 0
    %163 = vmatprep.subr.bf16.mxu0 0
    %164 = vmatpush2.bf16.msra.mxu0 0
    %165 = vmatprep.subr.bf16.mxu0 0
    %166 = vmatpush2.bf16.msra.mxu0 0
    %167 = vmatprep.mubr.bf16.mxu0 0
    %168 = vmatmul.mubr.bf16.gmra.mxu0 %v63
    %v169 = vpop.f32.mrf.mxu0
    %v170 = vadd.f32 %v85, %v169
    %v171 = vpop.f32.mrf.mxu0
    %v172 = vpop.f32.mrf.mxu0
    %v173 = vpop.f32.mrf.mxu0
    %174 = vdwg.mxu0
    %176 = vset.pattern.permute.xlu0 11
    %177 = vperm.xlu0 %176, %v170
    %v178 = vpop.permute.xlu0 %177
    %v180 = vadd.f32 %v170, %v178
    %vm181 = vcmask 89088
    %182 = vst.msk [vmem:[#allocation2] sm:$0xff] %vm181, %v180
    // Predicated region
    $region22: #{tpu_custom_call.1} parent=1 // pred_check
      _
    $region23: #{tpu_custom_call.1} parent=1 // pred_check_branch
      %184 = sbr.rel (0) target = $region25
    $region24: #{tpu_custom_call.1} parent=1 // pred_region
      %s186 = ssub.s32 128, 128
      %187 = vsyncadd [#allocation3], %s186
      %s189 = sshll.u32 [#allocation2], 4
      %s190 = int_to_ptr.vmem [resolvable:$true] %s189
      %192 = dma.vmem_to_hbm [thread:$0]  %s190, 128, %s5, [#allocation3]
    $region25: #{tpu_custom_call.1} parent=1 // pred_fallthru
      _
    // Predicated region
    $region26: #{tpu_custom_call.1} parent=1 // pred_check
      _
    $region27: #{tpu_custom_call.1} parent=1 // pred_check_branch
      %194 = sbr.rel (0) target = $region29
    $region28: #{tpu_custom_call.1} parent=1 // pred_region
      %195 = dma.done [#allocation3], 128
    $region29: #{tpu_custom_call.1} parent=1 // pred_fallthru
      _
    %196 = vsyncpa [#allocation3], 1

</llo_original>
